<compile_context>
chip_gen: v6e
topology: v6e:2x2x1
jax: 0.10.0
libtpu: 0.0.40
codegen_flags: <defaults>
</compile_context>

<pallas_src>
import functools

import jax
import jax.numpy as jnp
import numpy as np
from jax.experimental import pallas as pl
from jax.experimental.pallas import tpu as pltpu

_LANES = 1024                    # lane-dense last dim (multiple of 128)
_SUBLANES = 8
_TARGET_BLOCK_BYTES = 1 << 20    # ~1 MiB per input block


def _fused_residual_kernel(x_ref, o_ref, *, fn):
    x = x_ref[...].astype(jnp.float32)
    o_ref[...] = (fn(x) + x).astype(o_ref.dtype)


def _residual_add_kernel(y_ref, x_ref, o_ref):
    o_ref[...] = (y_ref[...].astype(jnp.float32)
                  + x_ref[...].astype(jnp.float32)).astype(o_ref.dtype)


def _round_up(n, m):
    return ((n + m - 1) // m) * m


def _tiling(n_elems, itemsize):
    """Pick (rows_padded, block_rows) for a lane-dense (rows, _LANES) layout."""
    rows = max(1, -(-n_elems // _LANES))                     # ceil div
    tb = max(_SUBLANES, _TARGET_BLOCK_BYTES // (_LANES * itemsize))
    tb = (tb // _SUBLANES) * _SUBLANES                       # multiple of 8 sublanes
    tb = min(tb, _round_up(rows, _SUBLANES))                 # tiny input -> 1 block
    rows_padded = _round_up(rows, tb)
    return rows_padded, tb


def _as_tiles(a, rows_padded):
    flat = a.reshape(-1)
    pad = rows_padded * _LANES - flat.size
    if pad:
        flat = jnp.pad(flat, (0, pad))
    return flat.reshape(rows_padded, _LANES)


def residual(fn, x, *args, fuse_elementwise=False, **kwargs):
    """Pallas equivalent of Residual(fn)(x, *args, **kwargs) = fn(x, ...) + x."""
    orig_shape, orig_dtype, n = x.shape, x.dtype, x.size
    rows, tb = _tiling(n, x.dtype.itemsize)
    grid = (rows // tb,)

    block = pl.BlockSpec((tb, _LANES), lambda i: (i, 0))
    out_shape = jax.ShapeDtypeStruct((rows, _LANES), orig_dtype)
    cparams = pltpu.CompilerParams(dimension_semantics=("parallel",))

    x2d = _as_tiles(x, rows)

    if fuse_elementwise:
        fn_x = lambda t: fn(t, *args, **kwargs)
        out2d = pl.pallas_call(
            functools.partial(_fused_residual_kernel, fn=fn_x),
            out_shape=out_shape,
            grid_spec=pltpu.PrefetchScalarGridSpec(
                num_scalar_prefetch=0, grid=grid,
                in_specs=[block], out_specs=block),
            compiler_params=cparams,
        )(x2d)
    else:
        # TODO(synk): arbitrary sub-modules (conv/attention) have no generic
        # in-kernel lowering; fn runs as regular JAX here and only the residual
        # add is fused in Pallas.
        y = fn(x, *args, **kwargs)
        assert y.shape == orig_shape, "Residual requires fn(x).shape == x.shape"
        y2d = _as_tiles(y, rows)
        out2d = pl.pallas_call(
            _residual_add_kernel,
            out_shape=out_shape,
            grid_spec=pltpu.PrefetchScalarGridSpec(
                num_scalar_prefetch=0, grid=grid,
                in_specs=[block, block], out_specs=block),
            compiler_params=cparams,
        )(y2d, x2d)

    return out2d.reshape(-1)[:n].reshape(orig_shape)


if __name__ == "__main__":
    B, C, H, W = 2, 4, 16, 16          # small NCHW feature map, as in 2d ddpm
    key = jax.random.PRNGKey(0)
    kx, kw = jax.random.split(key)
    x = jax.random.normal(kx, (B, C, H, W), dtype=jnp.float32)

    # Case 1: elementwise fn, fused inside the Pallas kernel (one HBM read of x).
    def act(t):
        return jax.nn.gelu(t) * 0.5

    out1 = jax.block_until_ready(residual(act, x, fuse_elementwise=True))
    ref1 = act(x) + x
    np.testing.assert_allclose(np.asarray(out1), np.asarray(ref1),
                               rtol=1e-5, atol=1e-5)

    # Case 2: non-elementwise fn (1x1 channel-mixing "conv"): fn runs in JAX,
    # the residual add runs in the Pallas kernel.
    w = jax.random.normal(kw, (C, C), dtype=jnp.float32) / np.sqrt(C)

    def channel_mix(t):
        return jnp.einsum('oc,bchw->bohw', w, t)

    out2 = jax.block_until_ready(residual(channel_mix, x))
    ref2 = channel_mix(x) + x
    np.testing.assert_allclose(np.asarray(out2), np.asarray(ref2),
                               rtol=1e-5, atol=1e-5)

    print("KERNEL_OK")
</pallas_src>

<mosaic_0001>
module attributes {stable_mosaic.version = 11 : i64} {
  func.func @_fused_residual_kernel(%arg0: i32, %arg1: memref<8x1024xf32, #tpu.memory_space<vmem>>, %arg2: memref<8x1024xf32, #tpu.memory_space<vmem>>) attributes {dimension_semantics = [#tpu.dimension_semantics<parallel>], iteration_bounds = array<i64: 1>, scalar_prefetch = 0 : i64, scratch_operands = 0 : i64, tpu.core_type = #tpu.core_type<tc>, window_params = [{transform_indices = @transform_0, window_bounds = array<i64: 8, 1024>}, {transform_indices = @transform_1, window_bounds = array<i64: 8, 1024>}]} {
    %c0 = arith.constant 0 : index
    %c0_0 = arith.constant 0 : index
    %0 = vector.load %arg1[%c0, %c0_0] : memref<8x1024xf32, #tpu.memory_space<vmem>>, vector<8x1024xf32>
    %1 = arith.mulf %0, %0 : vector<8x1024xf32>
    %2 = arith.mulf %0, %1 : vector<8x1024xf32>
    %cst = arith.constant 4.471500e-02 : f32
    %3 = vector.broadcast %cst : f32 to vector<8x1024xf32>
    %4 = arith.mulf %3, %2 : vector<8x1024xf32>
    %5 = arith.addf %0, %4 : vector<8x1024xf32>
    %cst_1 = arith.constant 0.797884583 : f32
    %6 = vector.broadcast %cst_1 : f32 to vector<8x1024xf32>
    %7 = arith.mulf %6, %5 : vector<8x1024xf32>
    %8 = math.tanh %7 : vector<8x1024xf32>
    %cst_2 = arith.constant 1.000000e+00 : f32
    %9 = vector.broadcast %cst_2 : f32 to vector<8x1024xf32>
    %10 = arith.addf %9, %8 : vector<8x1024xf32>
    %cst_3 = arith.constant 5.000000e-01 : f32
    %11 = vector.broadcast %cst_3 : f32 to vector<8x1024xf32>
    %12 = arith.mulf %11, %10 : vector<8x1024xf32>
    %13 = arith.mulf %0, %12 : vector<8x1024xf32>
    %cst_4 = arith.constant 5.000000e-01 : f32
    %14 = vector.broadcast %cst_4 : f32 to vector<8x1024xf32>
    %15 = arith.mulf %13, %14 : vector<8x1024xf32>
    %16 = arith.addf %15, %0 : vector<8x1024xf32>
    %c0_5 = arith.constant 0 : index
    %c0_6 = arith.constant 0 : index
    %17 = vector.load %arg2[%c0_5, %c0_6] : memref<8x1024xf32, #tpu.memory_space<vmem>>, vector<8x1024xf32>
    tpu.vector_store %arg2[%c0_5, %c0_6], %16 {strides = array<i32>} : memref<8x1024xf32, #tpu.memory_space<vmem>>, vector<8x1024xf32>,
    return
  }
  func.func @transform_0(%arg0: i32) -> (i32, i32) {
    %c0_i32 = arith.constant 0 : i32
    %c0_i32_0 = arith.constant 0 : i32
    return %arg0, %c0_i32 : i32, i32
  }
  func.func @transform_1(%arg0: i32) -> (i32, i32) {
    %c0_i32 = arith.constant 0 : i32
    %c0_i32_0 = arith.constant 0 : i32
    return %arg0, %c0_i32 : i32, i32
  }
}

</mosaic_0001>

<llo_original>
// kernel: tpu_custom_call.1
$region0: #{tpu_custom_call.1}
  #allocation0 [shape = 'u32[]', space=smem, size = 0x4, offset = 0x4, fixed_abs, tag = 'smem constant byte address 0x4 - core index']
  #allocation1 [shape = 'u32[144,128]{1,0:T(1,128)}', space=vmem, size = 0x12000, scoped, tag = 'internal scratch']
  %s0 = inlined_call_operand.hbm [shape: f32[8,1024], index: 0, kind: input, shape index: {}]
  %s1 = inlined_call_operand.hbm [shape: f32[8,1024], index: 1, kind: output, shape index: {}]
  %s2 = sld [smem:[#allocation0]]
  $region18: #{tpu_custom_call.1} parent=0
    _
  %s4 = ssub.s32 1, %s2
  %s5 = scalar_select 0, %s4, %s2
  $region1: #{tpu_custom_call.1} parent=0
    #allocation2 [shape = 'u8[32768]{0}', space=vmem, size = 0x8000, scoped, tag = 'input window, operand 0, single buffered']
    #allocation3 [shape = 's32[1]{0}', space=sflag, size = 0x4, scoped, tag = 'scoped memory for tpu_custom_call.1']
    #allocation4 [shape = 's32[1]{0}', space=sflag, size = 0x4, scoped, tag = 'scoped memory for tpu_custom_call.1']
    #allocation5 [shape = 'u8[32768]{0}', space=vmem, size = 0x8000, scoped, tag = 'output window, operand 0, single buffered']
    %6 = vsyncpa [#allocation3], 0
    %7 = vsyncpa [#allocation4], 0
    // Predicated region
    $region2: #{tpu_custom_call.1} parent=1 // pred_check
      _
    $region3: #{tpu_custom_call.1} parent=1 // pred_check_branch
      %9 = sbr.rel (0) target = $region5
    $region4: #{tpu_custom_call.1} parent=1 // pred_region
      %s11 = ssub.s32 1024, 1024
      %12 = vsyncadd [#allocation3], %s11
      %s14 = sshll.u32 [#allocation2], 4
      %s15 = int_to_ptr.vmem [resolvable:$true] %s14
      %17 = dma.hbm_to_vmem [thread:$0]  %s0, 1024, %s15, [#allocation3]
    $region5: #{tpu_custom_call.1} parent=1 // pred_fallthru
      _
    // Predicated region
    $region6: #{tpu_custom_call.1} parent=1 // pred_check
      _
    $region7: #{tpu_custom_call.1} parent=1 // pred_check_branch
      %19 = sbr.rel (0) target = $region9
    $region8: #{tpu_custom_call.1} parent=1 // pred_region
      %20 = dma.done [#allocation3], 1024
    $region9: #{tpu_custom_call.1} parent=1 // pred_fallthru
      _
    %v21 = vld [vmem:[#allocation2] sm:$0xff]
    %v22 = vld [vmem:[#allocation2 + $0x8] sm:$0xff]
    %v23 = vld [vmem:[#allocation2 + $0x10] sm:$0xff]
    %v24 = vld [vmem:[#allocation2 + $0x18] sm:$0xff]
    %v25 = vld [vmem:[#allocation2 + $0x20] sm:$0xff]
    %v26 = vld [vmem:[#allocation2 + $0x28] sm:$0xff]
    %v27 = vld [vmem:[#allocation2 + $0x30] sm:$0xff]
    %v28 = vld [vmem:[#allocation2 + $0x38] sm:$0xff]
    %v29 = vmul.f32 %v21, %v21
    %v30 = vmul.f32 %v22, %v22
    %v31 = vmul.f32 %v23, %v23
    %v32 = vmul.f32 %v24, %v24
    %v33 = vmul.f32 %v25, %v25
    %v34 = vmul.f32 %v26, %v26
    %v35 = vmul.f32 %v27, %v27
    %v36 = vmul.f32 %v28, %v28
    %v37 = vmul.f32 %v21, %v29
    %v38 = vmul.f32 %v22, %v30
    %v39 = vmul.f32 %v23, %v31
    %v40 = vmul.f32 %v24, %v32
    %v41 = vmul.f32 %v25, %v33
    %v42 = vmul.f32 %v26, %v34
    %v43 = vmul.f32 %v27, %v35
    %v44 = vmul.f32 %v28, %v36
    %v45 = vmul.f32 %v37, 0.044715
    %v46 = vmul.f32 %v38, 0.044715
    %v47 = vmul.f32 %v39, 0.044715
    %v48 = vmul.f32 %v40, 0.044715
    %v49 = vmul.f32 %v41, 0.044715
    %v50 = vmul.f32 %v42, 0.044715
    %v51 = vmul.f32 %v43, 0.044715
    %v52 = vmul.f32 %v44, 0.044715
    %v53 = vadd.f32 %v21, %v45
    %v54 = vadd.f32 %v22, %v46
    %v55 = vadd.f32 %v23, %v47
    %v56 = vadd.f32 %v24, %v48
    %v57 = vadd.f32 %v25, %v49
    %v58 = vadd.f32 %v26, %v50
    %v59 = vadd.f32 %v27, %v51
    %v60 = vadd.f32 %v28, %v52
    %v61 = vmul.f32 %v53, 0.7978846
    %v62 = vmul.f32 %v54, 0.7978846
    %v63 = vmul.f32 %v55, 0.7978846
    %v64 = vmul.f32 %v56, 0.7978846
    %v65 = vmul.f32 %v57, 0.7978846
    %v66 = vmul.f32 %v58, 0.7978846
    %v67 = vmul.f32 %v59, 0.7978846
    %v68 = vmul.f32 %v60, 0.7978846
    %v69 = vtanh.pop %v61
    %v70 = vtanh.pop %v62
    %v71 = vtanh.pop %v63
    %v72 = vtanh.pop %v64
    %v73 = vtanh.pop %v65
    %v74 = vtanh.pop %v66
    %v75 = vtanh.pop %v67
    %v76 = vtanh.pop %v68
    %v77 = vadd.f32 %v69, 1.0
    %v78 = vadd.f32 %v70, 1.0
    %v79 = vadd.f32 %v71, 1.0
    %v80 = vadd.f32 %v72, 1.0
    %v81 = vadd.f32 %v73, 1.0
    %v82 = vadd.f32 %v74, 1.0
    %v83 = vadd.f32 %v75, 1.0
    %v84 = vadd.f32 %v76, 1.0
    %v85 = vmul.f32 %v77, 0.5
    %v86 = vmul.f32 %v78, 0.5
    %v87 = vmul.f32 %v79, 0.5
    %v88 = vmul.f32 %v80, 0.5
    %v89 = vmul.f32 %v81, 0.5
    %v90 = vmul.f32 %v82, 0.5
    %v91 = vmul.f32 %v83, 0.5
    %v92 = vmul.f32 %v84, 0.5
    %v93 = vmul.f32 %v21, %v85
    %v94 = vmul.f32 %v22, %v86
    %v95 = vmul.f32 %v23, %v87
    %v96 = vmul.f32 %v24, %v88
    %v97 = vmul.f32 %v25, %v89
    %v98 = vmul.f32 %v26, %v90
    %v99 = vmul.f32 %v27, %v91
    %v100 = vmul.f32 %v28, %v92
    %v101 = vmul.f32 %v93, 0.5
    %v102 = vmul.f32 %v94, 0.5
    %v103 = vmul.f32 %v95, 0.5
    %v104 = vmul.f32 %v96, 0.5
    %v105 = vmul.f32 %v97, 0.5
    %v106 = vmul.f32 %v98, 0.5
    %v107 = vmul.f32 %v99, 0.5
    %v108 = vmul.f32 %v100, 0.5
    %v109 = vadd.f32 %v101, %v21
    %v110 = vadd.f32 %v102, %v22
    %v111 = vadd.f32 %v103, %v23
    %v112 = vadd.f32 %v104, %v24
    %v113 = vadd.f32 %v105, %v25
    %v114 = vadd.f32 %v106, %v26
    %v115 = vadd.f32 %v107, %v27
    %v116 = vadd.f32 %v108, %v28
    %117 = vst [vmem:[#allocation5] sm:$0xff] %v109
    %118 = vst [vmem:[#allocation5 + $0x8] sm:$0xff] %v110
    %119 = vst [vmem:[#allocation5 + $0x10] sm:$0xff] %v111
    %120 = vst [vmem:[#allocation5 + $0x18] sm:$0xff] %v112
    %121 = vst [vmem:[#allocation5 + $0x20] sm:$0xff] %v113
    %122 = vst [vmem:[#allocation5 + $0x28] sm:$0xff] %v114
    %123 = vst [vmem:[#allocation5 + $0x30] sm:$0xff] %v115
    %124 = vst [vmem:[#allocation5 + $0x38] sm:$0xff] %v116
    // Predicated region
    $region10: #{tpu_custom_call.1} parent=1 // pred_check
      _
    $region11: #{tpu_custom_call.1} parent=1 // pred_check_branch
      %126 = sbr.rel (0) target = $region13
    $region12: #{tpu_custom_call.1} parent=1 // pred_region
      %s128 = ssub.s32 1024, 1024
      %129 = vsyncadd [#allocation4], %s128
      %s131 = sshll.u32 [#allocation5], 4
      %s132 = int_to_ptr.vmem [resolvable:$true] %s131
      %134 = dma.vmem_to_hbm [thread:$0]  %s132, 1024, %s1, [#allocation4]
    $region13: #{tpu_custom_call.1} parent=1 // pred_fallthru
      _
    // Predicated region
    $region14: #{tpu_custom_call.1} parent=1 // pred_check
      _
    $region15: #{tpu_custom_call.1} parent=1 // pred_check_branch
      %136 = sbr.rel (0) target = $region17
    $region16: #{tpu_custom_call.1} parent=1 // pred_region
      %137 = dma.done [#allocation4], 1024
    $region17: #{tpu_custom_call.1} parent=1 // pred_fallthru
      _
    %138 = vsyncpa [#allocation3], 1
    %139 = vsyncpa [#allocation4], 1

</llo_original>
